<compile_context>
chip_gen: v5e
topology: v5e:2x2
jax: 0.10.0
libtpu: 0.0.40
codegen_flags: <defaults>
</compile_context>

<pallas_src>
import math

import jax
import jax.numpy as jnp
from jax.experimental import pallas as pl
from jax.experimental.pallas import tpu as pltpu


_LANE = 128            # lane width (last-dim tiling unit)
_F32_SUBLANE = 8
_BF16_SUBLANE = 16
_MAX_BT_TILE = 2048    # diminishing returns past ~1-2K rows (≥85% of roofline)


def _round_up(x: int, m: int) -> int:
    return ((x + m - 1) // m) * m


def _round_down(x: int, m: int) -> int:
    return (x // m) * m


def _vmem_capacity_bytes() -> int:
    """Per-core VMEM capacity; conservative fallback is v7x's 64 MiB/TC."""
    try:
        return int(pltpu.get_tpu_info().vmem_capacity_bytes)
    except Exception:
        return 64 * 1024 * 1024


# --------------------------------------------------------------------------
# Kernels
# --------------------------------------------------------------------------
def _dense_kernel(x_ref, w_ref, o_ref):
    # x_ref: (tile_bt, input_size); w_ref: (input_size, n_pad) resident;
    # o_ref: (tile_bt, n_pad)  -- one lane-dense MXU matmul per BT tile.
    o_ref[...] = jnp.dot(
        x_ref[...], w_ref[...], preferred_element_type=jnp.float32
    ).astype(o_ref.dtype)


def _per_group_kernel(x_ref, w_ref, o_ref):
    # x_ref: (tile_bt, ws); w_ref: (1, ws, hsg); o_ref: (tile_bt, hsg)
    o_ref[...] = jnp.dot(
        x_ref[...], w_ref[0], preferred_element_type=jnp.float32
    ).astype(o_ref.dtype)


# --------------------------------------------------------------------------
# Parameter preparation (hoist/cache this in real models)
# --------------------------------------------------------------------------
def build_block_diagonal_weight(weight, hidden_pad=None, dtype=None):
    """Expand (G, ws, hsg) -> block-diagonal (G*ws, hidden_pad). Build once."""
    groups, ws, hsg = weight.shape
    input_size = groups * ws
    hidden_size = groups * hsg
    if dtype is not None:
        weight = weight.astype(dtype)
    gidx = jnp.arange(groups)
    w_bd = jnp.zeros((groups, ws, groups, hsg), dtype=weight.dtype)
    w_bd = w_bd.at[gidx, :, gidx, :].set(weight)
    w_bd = w_bd.reshape(input_size, hidden_size)
    if hidden_pad is not None and hidden_pad != hidden_size:
        w_bd = jnp.pad(w_bd, ((0, 0), (0, hidden_pad - hidden_size)))
    return w_bd


# --------------------------------------------------------------------------
# Wrapper
# --------------------------------------------------------------------------
def grouped_linear_einsum(
    x: jax.Array,
    weight: jax.Array,
    *,
    compute_dtype=jnp.bfloat16,   # None -> compute in x.dtype (exact f32 path)
    w_bd: jax.Array | None = None,  # optional pre-built block-diagonal weight
) -> jax.Array:
    """x: (B, T, input_size); weight: (G, ws, hsg) -> (B, T, hidden_size)."""
    b, t, input_size = x.shape
    groups, ws, hsg = weight.shape
    assert input_size == groups * ws
    hidden_size = groups * hsg
    bt = b * t
    out_dtype = x.dtype

    cdt = jnp.dtype(compute_dtype) if compute_dtype is not None else jnp.dtype(x.dtype)
    dsize = cdt.itemsize
    osize = jnp.dtype(out_dtype).itemsize
    sublane = _BF16_SUBLANE if dsize == 2 else _F32_SUBLANE

    x2 = x.reshape(bt, input_size).astype(cdt)

    # ---- per-chip VMEM budgeting -------------------------------------------
    vmem_cap = _vmem_capacity_bytes()
    vmem_limit = min(int(vmem_cap * 0.85), vmem_cap - (4 << 20))
    budget = vmem_limit - (2 << 20)   # headroom for compiler-internal scratch

    n_pad = _round_up(hidden_size, _LANE)            # lane-dense output width
    wbd_bytes = input_size * n_pad * dsize           # resident, single-buffered

    # Use the compact per-group weight when the expanded block-diagonal one
    # would eat too much of the VMEM budget and group dims are 128-aligned.
    per_group_ok = (ws % _LANE == 0) and (hsg % _LANE == 0) and groups > 1
    use_per_group = per_group_ok and (wbd_bytes > budget // 3)
    # TODO(synk): add a K (input_size) grid axis with an f32 accumulator for
    # very large input_size where even the per-group weight block exceeds VMEM.

    if not use_per_group:
        # ---- block-diagonal path --------------------------------------------
        if w_bd is None:
            w_bd_arr = build_block_diagonal_weight(weight, hidden_pad=n_pad, dtype=cdt)
        else:
            w_bd_arr = w_bd.astype(cdt)
            if w_bd_arr.shape[1] != n_pad:
                w_bd_arr = jnp.pad(
                    w_bd_arr, ((0, 0), (0, n_pad - w_bd_arr.shape[1])))

        # Biggest BT tile that fits: resident weight (1 buffer) + double-
        # buffered x and out tiles.
        row_bytes = 2 * (input_size * dsize + n_pad * osize)
        tile = (budget - wbd_bytes) // row_bytes
        tile = max(sublane,
                   min(_round_down(tile, sublane), _MAX_BT_TILE,
                       _round_up(bt, sublane)))
        n_tiles = pl.cdiv(bt, tile)
        bt_pad = n_tiles * tile
        if bt_pad != bt:
            x2 = jnp.pad(x2, ((0, bt_pad - bt), (0, 0)))

        cost = pl.CostEstimate(
            flops=2 * bt * input_size * hidden_size,
            transcendentals=0,
            bytes_accessed=(bt_pad * input_size * dsize
                            + bt_pad * n_pad * osize
                            + input_size * n_pad * dsize),
        )

        out2 = pl.pallas_call(
            _dense_kernel,
            out_shape=jax.ShapeDtypeStruct((bt_pad, n_pad), out_dtype),
            grid_spec=pltpu.PrefetchScalarGridSpec(
                num_scalar_prefetch=0,
                grid=(n_tiles,),
                in_specs=[
                    # streaming x tile over the BT axis (double-buffered)
                    pl.BlockSpec((tile, input_size), lambda i: (i, 0)),
                    # weight: constant index_map -> DMA'd once, resident;
                    # single-buffer it to free VMEM for a larger BT tile
                    pl.BlockSpec((input_size, n_pad), lambda i: (0, 0),
                                 pipeline_mode=pl.Buffered(1)),
                ],
                out_specs=pl.BlockSpec((tile, n_pad), lambda i: (i, 0)),
            ),
            compiler_params=pltpu.CompilerParams(
                dimension_semantics=("parallel",),   # megacore sharding on v7x
                vmem_limit_bytes=vmem_limit,
            ),
            cost_estimate=cost,
        )(x2, w_bd_arr)

        out2 = out2[:bt, :hidden_size]
        return out2.reshape(b, t, hidden_size)

    # ---- per-group path (large, 128-aligned weights) -------------------------
    w = weight.astype(cdt)
    row_bytes = 2 * (ws * dsize + hsg * osize)
    wg_bytes = 2 * ws * hsg * dsize          # per-group weight block, 2 buffers
    tile = (budget - wg_bytes) // row_bytes
    tile = max(sublane,
               min(_round_down(tile, sublane), _MAX_BT_TILE,
                   _round_up(bt, sublane)))
    n_tiles = pl.cdiv(bt, tile)
    bt_pad = n_tiles * tile
    if bt_pad != bt:
        x2 = jnp.pad(x2, ((0, bt_pad - bt), (0, 0)))

    cost = pl.CostEstimate(
        flops=2 * bt * input_size * hsg,
        transcendentals=0,
        bytes_accessed=(bt_pad * input_size * dsize
                        + bt_pad * hidden_size * osize
                        + n_tiles * groups * ws * hsg * dsize),
    )

    out2 = pl.pallas_call(
        _per_group_kernel,
        out_shape=jax.ShapeDtypeStruct((bt_pad, hidden_size), out_dtype),
        grid_spec=pltpu.PrefetchScalarGridSpec(
            num_scalar_prefetch=0,
            grid=(n_tiles, groups),
            in_specs=[
                pl.BlockSpec((tile, ws), lambda i, g: (i, g)),
                pl.BlockSpec((1, ws, hsg), lambda i, g: (g, 0, 0)),
            ],
            out_specs=pl.BlockSpec((tile, hsg), lambda i, g: (i, g)),
        ),
        compiler_params=pltpu.CompilerParams(
            dimension_semantics=("parallel", "parallel"),
            vmem_limit_bytes=vmem_limit,
        ),
        cost_estimate=cost,
    )(x2, w)

    out2 = out2[:bt]
    return out2.reshape(b, t, hidden_size)


# --------------------------------------------------------------------------
# Parameter init (matches torch.nn.init.kaiming_uniform_(w, a=sqrt(5)))
# --------------------------------------------------------------------------
def init_weight(key, groups: int, ws: int, hsg: int) -> jax.Array:
    fan_in = ws * hsg
    gain = math.sqrt(2.0 / (1.0 + 5.0))
    bound = gain * math.sqrt(3.0 / fan_in)
    return jax.random.uniform(
        key, (groups, ws, hsg), dtype=jnp.float32, minval=-bound, maxval=bound
    )


if __name__ == "__main__":
    key = jax.random.PRNGKey(0)
    kx, kw = jax.random.split(key)

    # small shapes: batch=2, seq=8, input_size=32, hidden_size=32, groups=4
    b, t = 2, 8
    input_size, hidden_size, groups = 32, 32, 4
    ws = input_size // groups
    hsg = hidden_size // groups

    x = jax.random.normal(kx, (b, t, input_size), dtype=jnp.float32)
    weight = init_weight(kw, groups, ws, hsg)

    # reference in plain JAX (same semantics as the torch einsum)
    ref = jnp.einsum(
        "btgi,gih->btgh", x.reshape(b, t, groups, ws), weight
    ).reshape(b, t, hidden_size)

    # default path: bf16 compute (mem-bound optimum), f32 accumulation/output
    out = jax.block_until_ready(grouped_linear_einsum(x, weight))
    assert out.shape == (b, t, hidden_size)
    assert out.dtype == x.dtype
    assert jnp.allclose(out, ref, atol=3e-2, rtol=3e-2)

    # exact-precision path (bit-level match to the f32 module numerics)
    out_f32 = jax.block_until_ready(
        grouped_linear_einsum(x, weight, compute_dtype=None))
    assert jnp.allclose(out_f32, ref, atol=1e-5, rtol=1e-5)

    print("KERNEL_OK")
</pallas_src>

<mosaic_0001>
module attributes {stable_mosaic.version = 11 : i64} {
  func.func @_dense_kernel(%arg0: i32, %arg1: memref<16x32xbf16, #tpu.memory_space<vmem>>, %arg2: memref<32x128xbf16, #tpu.memory_space<vmem>>, %arg3: memref<16x128xf32, #tpu.memory_space<vmem>>) attributes {dimension_semantics = [#tpu.dimension_semantics<parallel>], iteration_bounds = array<i64: 1>, scalar_prefetch = 0 : i64, scratch_operands = 0 : i64, tpu.core_type = #tpu.core_type<tc>, window_params = [{transform_indices = @transform_0, window_bounds = array<i64: 16, 32>}, {pipeline_mode = #tpu.pipeline_mode<synchronous>, transform_indices = @transform_1, window_bounds = array<i64: 32, 128>}, {transform_indices = @transform_2, window_bounds = array<i64: 16, 128>}]} {
    %c0 = arith.constant 0 : index
    %c0_0 = arith.constant 0 : index
    %0 = vector.load %arg1[%c0, %c0_0] : memref<16x32xbf16, #tpu.memory_space<vmem>>, vector<16x32xbf16>
    %c0_1 = arith.constant 0 : index
    %c0_2 = arith.constant 0 : index
    %1 = vector.load %arg2[%c0_1, %c0_2] : memref<32x128xbf16, #tpu.memory_space<vmem>>, vector<32x128xbf16>
    %cst = arith.constant dense<0.000000e+00> : vector<16x128xf32>
    %2 = tpu.matmul %0, %1, %cst {dimension_numbers = #tpu.dot_dimension_numbers<[1], [0], [0], [1], [0, 0, 1, 1], [], []>} : vector<16x32xbf16>, vector<32x128xbf16>, vector<16x128xf32> -> vector<16x128xf32>
    %c0_3 = arith.constant 0 : index
    %c0_4 = arith.constant 0 : index
    %3 = vector.load %arg3[%c0_3, %c0_4] : memref<16x128xf32, #tpu.memory_space<vmem>>, vector<16x128xf32>
    tpu.vector_store %arg3[%c0_3, %c0_4], %2 {strides = array<i32>} : memref<16x128xf32, #tpu.memory_space<vmem>>, vector<16x128xf32>,
    return
  }
  func.func @transform_0(%arg0: i32) -> (i32, i32) {
    %c0_i32 = arith.constant 0 : i32
    %c0_i32_0 = arith.constant 0 : i32
    return %arg0, %c0_i32 : i32, i32
  }
  func.func @transform_1(%arg0: i32) -> (i32, i32) {
    %c0_i32 = arith.constant 0 : i32
    %c0_i32_0 = arith.constant 0 : i32
    %c0_i32_1 = arith.constant 0 : i32
    return %c0_i32, %c0_i32_0 : i32, i32
  }
  func.func @transform_2(%arg0: i32) -> (i32, i32) {
    %c0_i32 = arith.constant 0 : i32
    %c0_i32_0 = arith.constant 0 : i32
    return %arg0, %c0_i32 : i32, i32
  }
}

</mosaic_0001>

<llo_original>
// kernel: tpu_custom_call.1
$region0: #{tpu_custom_call.1}
  #allocation0 [shape = 'u32[]', space=smem, size = 0x4, offset = 0x4, fixed_abs, tag = 'smem constant byte address 0x4 - core index']
  #allocation1 [shape = 'u32[72,128]{1,0:T(1,128)}', space=vmem, size = 0x9000, scoped, tag = 'internal scratch']
  %s0 = inlined_call_operand.hbm [shape: bf16[16,32], index: 0, kind: input, shape index: {}]
  %s1 = inlined_call_operand.hbm [shape: bf16[32,128], index: 1, kind: input, shape index: {}]
  %s2 = inlined_call_operand.hbm [shape: f32[16,128], index: 2, kind: output, shape index: {}]
  %s3 = sld [smem:[#allocation0]]
  $region26: #{tpu_custom_call.1} parent=0
    _
  %s5 = ssub.s32 1, %s3
  %s6 = scalar_select 0, %s5, %s3
  $region1: #{tpu_custom_call.1} parent=0
    #allocation2 [shape = 'u8[4096]{0}', space=vmem, size = 0x1000, scoped, tag = 'input window, operand 0, single buffered']
    #allocation3 [shape = 's32[1]{0}', space=sflag, size = 0x4, scoped, tag = 'scoped memory for tpu_custom_call.1']
    #allocation4 [shape = 's32[1]{0}', space=sflag, size = 0x4, scoped, tag = 'scoped memory for tpu_custom_call.1']
    #allocation5 [shape = 'u8[8192]{0}', space=vmem, size = 0x2000, scoped, tag = 'input window, operand 1, single buffered']
    #allocation6 [shape = 's32[1]{0}', space=sflag, size = 0x4, scoped, tag = 'scoped memory for tpu_custom_call.1']
    #allocation7 [shape = 'u8[8192]{0}', space=vmem, size = 0x2000, scoped, tag = 'output window, operand 0, single buffered']
    %7 = vsyncpa [#allocation3], 0
    %8 = vsyncpa [#allocation6], 0
    %9 = vsyncpa [#allocation4], 0
    // Predicated region
    $region2: #{tpu_custom_call.1} parent=1 // pred_check
      _
    $region3: #{tpu_custom_call.1} parent=1 // pred_check_branch
      %11 = sbr.rel (0) target = $region5
    $region4: #{tpu_custom_call.1} parent=1 // pred_region
      %13 = vsyncadd [#allocation3], 0
      %s14 = sshll.u32 %s0, 4
      %s15 = int_to_ptr.hbm [resolvable:$true] %s14
      %s16 = sshll.u32 [#allocation2], 4
      %s17 = int_to_ptr.vmem [resolvable:$true] %s16
      %22 = dma.hbm_to_vmem [thread:$0]  %s15, 128, %s17, [#allocation3], 64, 64, 4
    $region5: #{tpu_custom_call.1} parent=1 // pred_fallthru
      _
    // Predicated region
    $region6: #{tpu_custom_call.1} parent=1 // pred_check
      _
    $region7: #{tpu_custom_call.1} parent=1 // pred_check_branch
      %24 = sbr.rel (0) target = $region9
    $region8: #{tpu_custom_call.1} parent=1 // pred_region
      %26 = vsyncadd [#allocation6], 0
      %s27 = sshll.u32 %s1, 4
      %s28 = int_to_ptr.hbm [resolvable:$true] %s27
      %s29 = sshll.u32 [#allocation5], 4
      %s30 = int_to_ptr.vmem [resolvable:$true] %s29
      %35 = dma.hbm_to_vmem [thread:$0]  %s28, 256, %s30, [#allocation6], 64, 64, 4
    $region9: #{tpu_custom_call.1} parent=1 // pred_fallthru
      _
    // Predicated region
    $region10: #{tpu_custom_call.1} parent=1 // pred_check
      _
    $region11: #{tpu_custom_call.1} parent=1 // pred_check_branch
      %37 = sbr.rel (0) target = $region13
    $region12: #{tpu_custom_call.1} parent=1 // pred_region
      %39 = dma.done [#allocation3], 128
    $region13: #{tpu_custom_call.1} parent=1 // pred_fallthru
      _
    // Predicated region
    $region14: #{tpu_custom_call.1} parent=1 // pred_check
      _
    $region15: #{tpu_custom_call.1} parent=1 // pred_check_branch
      %41 = sbr.rel (0) target = $region17
    $region16: #{tpu_custom_call.1} parent=1 // pred_region
      %43 = dma.done [#allocation6], 256
    $region17: #{tpu_custom_call.1} parent=1 // pred_fallthru
      _
    %v45 = vld [vmem:[#allocation2] sm:$0xf]
    %v46 = vld [vmem:[#allocation2 + $0x4] sm:$0xf]
    %v47 = vld [vmem:[#allocation5] sm:$0xf]
    %v48 = vld [vmem:[#allocation5 + $0x4] sm:$0xf]
    %v49 = vld [vmem:[#allocation5 + $0x8] sm:$0xf]
    %v50 = vld [vmem:[#allocation5 + $0xc] sm:$0xf]
    %v53 = vunpack.c.l.b16 %v45
    %v54 = vunpack.c.l.b16 %v46
    %v55 = vpack.c.b16 %v54, %v53
    %v60 = vunpack.c.l.b16 %v47
    %v61 = vunpack.c.l.b16 %v48
    %v62 = vunpack.c.l.b16 %v49
    %v63 = vunpack.c.l.b16 %v50
    %v64 = vpack.c.b16 %v61, %v60
    %v65 = vpack.c.b16 %v63, %v62
    %vm68 = vcmask 261120
    %v70 = vsel %vm68, %v55, 0
    %72 = vmatpush.bf16.msra.mxu0 0
    %73 = vmatpush.bf16.msra.mxu0 0
    %74 = vmatpush.bf16.msra.mxu0 0
    %75 = vmatpush.bf16.msra.mxu0 0
    %76 = vmatpush.bf16.msra.mxu0 0
    %77 = vmatpush.bf16.msra.mxu0 0
    %78 = vmatpush.bf16.msra.mxu0 %v65
    %79 = vmatpush.bf16.msra.mxu0 %v64
    %80 = vmatmul.bf16.gmra.mxu0 %v70
    %v81 = vpop.f32.mrf.mxu0
    %v82 = vadd.f32 0.0, %v81
    %v83 = vpop.f32.mrf.mxu0
    %v84 = vadd.f32 0.0, %v83
    %85 = vdwg.mxu0
    %86 = vst [vmem:[#allocation7] sm:$0xff] %v82
    %87 = vst [vmem:[#allocation7 + $0x8] sm:$0xff] %v84
    // Predicated region
    $region18: #{tpu_custom_call.1} parent=1 // pred_check
      _
    $region19: #{tpu_custom_call.1} parent=1 // pred_check_branch
      %89 = sbr.rel (0) target = $region21
    $region20: #{tpu_custom_call.1} parent=1 // pred_region
      %91 = vsyncadd [#allocation4], 0
      %s92 = sshll.u32 [#allocation7], 4
      %s93 = int_to_ptr.vmem [resolvable:$true] %s92
      %s94 = sshll.u32 %s2, 4
      %s95 = int_to_ptr.hbm [resolvable:$true] %s94
      %100 = dma.vmem_to_hbm [thread:$0]  %s93, 256, %s95, [#allocation4], 128, 128, 8
    $region21: #{tpu_custom_call.1} parent=1 // pred_fallthru
      _
    // Predicated region
    $region22: #{tpu_custom_call.1} parent=1 // pred_check
      _
    $region23: #{tpu_custom_call.1} parent=1 // pred_check_branch
      %102 = sbr.rel (0) target = $region25
    $region24: #{tpu_custom_call.1} parent=1 // pred_region
      %104 = dma.done [#allocation4], 256
    $region25: #{tpu_custom_call.1} parent=1 // pred_fallthru
      _
    %105 = vsyncpa [#allocation3], 1
    %106 = vsyncpa [#allocation6], 1
    %107 = vsyncpa [#allocation4], 1

</llo_original>
